<compile_context>
chip_gen: v7x
topology: tpu7x:2x2x1
jax: 0.10.0
libtpu: 0.0.40
codegen_flags: <defaults>
</compile_context>

<pallas_src>
import functools

import jax
import jax.numpy as jnp
from jax import lax
from jax.experimental import pallas as pl
from jax.experimental.pallas import tpu as pltpu


def _mha_kernel(x_ref, wqkv_ref, proj_ref, o_ref, *, n_heads, compute_dtype):
    block_b, T, D = x_ref.shape
    H = n_heads
    cdt = compute_dtype

    # Fused Q/K/V projection for all batches in the block and all heads: one wide matmul.
    x2 = x_ref[...].reshape(block_b * T, D).astype(cdt)
    qkv = jnp.dot(x2, wqkv_ref[...], preferred_element_type=jnp.float32)   # (Bb*T, 3*H*D)

    rows = []
    for b in range(block_b):                       # static unroll: block_b is compile-time
        qkv_b = qkv[b * T:(b + 1) * T, :]          # (T, 3*H*D)
        heads = []
        for h in range(H):                         # static unroll: H is compile-time
            base = 3 * D * h
            q = qkv_b[:, base:base + D].astype(cdt)
            k = qkv_b[:, base + D:base + 2 * D].astype(cdt)
            v = qkv_b[:, base + 2 * D:base + 3 * D].astype(cdt)

            # qk_similarity = einsum('qd,kd->qk'): contract last dims, no k.T materialized.
            s = lax.dot_general(q, k, (((1,), (1,)), ((), ())),
                                preferred_element_type=jnp.float32)        # (T, T)
            s = s - jnp.max(s, axis=-1, keepdims=True)
            p = jnp.exp(s)                                                 # f32 (v5e-safe)
            l = jnp.sum(p, axis=-1, keepdims=True)                         # (T, 1)

            # Unnormalized p @ V, then deferred normalization on the (T, D) result.
            ho = jnp.dot(p.astype(cdt), v, preferred_element_type=jnp.float32)
            heads.append(ho * pl.reciprocal(l, approx=True))               # (T, D)
        rows.append(jnp.concatenate(heads, axis=1))                        # (T, H*D)
    cat = jnp.concatenate(rows, axis=0)                                    # (Bb*T, H*D)

    # "Concat heads then project" == one matmul against the full (H*D, D) projection.
    out = jnp.dot(cat.astype(cdt), proj_ref[...], preferred_element_type=jnp.float32)
    o_ref[...] = out.reshape(block_b, T, D).astype(o_ref.dtype)


def multi_head_attn(x, w_k, w_q, w_v, projection, *, block_b=None, compute_dtype=None):
    """x: (B,T,D); w_k/w_q/w_v: (H,D,D); projection: (H*D, D) -> out (B,T,D).

    compute_dtype: dtype for MXU operands (e.g. jnp.bfloat16 on v6e/v7x); accumulation
    and softmax math stay float32.
    """
    B, T, D = x.shape
    H = w_k.shape[0]
    cdt = jnp.dtype(compute_dtype) if compute_dtype is not None else x.dtype

    # Fuse per-head Q/K/V weights into one (D, 3*H*D) matrix (head-major column blocks).
    w_fused = jnp.concatenate([w_q, w_k, w_v], axis=-1)                    # (H, D, 3D)
    w_fused = jnp.transpose(w_fused, (1, 0, 2)).reshape(D, 3 * H * D).astype(cdt)
    proj = projection.astype(cdt)                                          # (H*D, D)

    if block_b is None:
        # Pack the whole (small) batch into one grid step to amortize per-step overhead.
        # For large B choose a divisor of B with block_b*T in the 128-512 row range
        # (and keep it a multiple of 8) so multiple parallel steps can shard across
        # v7x's two TensorCores.
        block_b = B
    assert B % block_b == 0, "block_b must divide the batch size"
    grid = (B // block_b,)

    kernel = functools.partial(_mha_kernel, n_heads=H, compute_dtype=cdt)

    return pl.pallas_call(
        kernel,
        out_shape=jax.ShapeDtypeStruct((B, T, D), x.dtype),
        grid_spec=pltpu.PrefetchScalarGridSpec(
            num_scalar_prefetch=0,
            grid=grid,
            in_specs=[
                pl.BlockSpec((block_b, T, D), lambda i: (i, 0, 0)),
                # Weights use a constant block index -> stay resident, no per-step re-DMA.
                pl.BlockSpec((D, 3 * H * D), lambda i: (0, 0)),
                pl.BlockSpec((H * D, D), lambda i: (0, 0)),
            ],
            out_specs=pl.BlockSpec((block_b, T, D), lambda i: (i, 0, 0)),
        ),
        compiler_params=pltpu.CompilerParams(
            dimension_semantics=("parallel",)),   # batch grid axis can shard across TCs
    )(x, w_fused, proj)


def _reference(x, w_k, w_q, w_v, projection):
    heads = []
    for h in range(w_k.shape[0]):
        K = jnp.einsum('btd,dk->btk', x, w_k[h])
        Q = jnp.einsum('btd,dq->btq', x, w_q[h])
        V = jnp.einsum('btd,dv->btv', x, w_v[h])
        s = jnp.einsum('bqd,bkd->bqk', Q, K)
        a = jax.nn.softmax(s, axis=2)
        heads.append(jnp.einsum('bta,bav->btv', a, V))
    cat = jnp.concatenate(heads, axis=2)
    return jnp.einsum('btp,pd->btd', cat, projection)


if __name__ == "__main__":
    B, T, D, H = 2, 8, 32, 2
    key = jax.random.PRNGKey(0)
    kx, kk, kq, kv = jax.random.split(key, 4)

    # xavier_normal_(W, gain=0.002): std = gain * sqrt(2 / (fan_in + fan_out))
    std = 0.002 * (2.0 / (D + D)) ** 0.5
    w_k = std * jax.random.normal(kk, (H, D, D), jnp.float32)
    w_q = std * jax.random.normal(kq, (H, D, D), jnp.float32)
    w_v = std * jax.random.normal(kv, (H, D, D), jnp.float32)

    # TODO(synk): the original module sets projection = eye(dim), which only type-checks
    # for n_heads == 1; generalized here to a deterministic (H*D, D) stack of identities
    # (reduces exactly to the original when H == 1).
    projection = jnp.tile(jnp.eye(D, dtype=jnp.float32), (H, 1))

    x = jax.random.normal(kx, (B, T, D), jnp.float32)

    ref = _reference(x, w_k, w_q, w_v, projection)

    # f32 MXU operands: tight check (approx reciprocal is the only deviation).
    out = jax.block_until_ready(multi_head_attn(x, w_k, w_q, w_v, projection))
    assert out.shape == (B, T, D)
    assert jnp.allclose(out, ref, rtol=2e-2, atol=2e-5), \
        f"f32 max abs err = {float(jnp.max(jnp.abs(out - ref)))}"

    # bf16 MXU operands (v6e/v7x fast path; softmax math stays f32): loose check.
    out_bf16 = jax.block_until_ready(
        multi_head_attn(x, w_k, w_q, w_v, projection, compute_dtype=jnp.bfloat16))
    assert jnp.allclose(out_bf16, ref, rtol=1e-1, atol=5e-4), \
        f"bf16 max abs err = {float(jnp.max(jnp.abs(out_bf16 - ref)))}"

    print("KERNEL_OK")
</pallas_src>

<mosaic_0001>
module attributes {stable_mosaic.version = 11 : i64} {
  func.func @_mha_kernel(%arg0: i32, %arg1: memref<2x8x32xf32, #tpu.memory_space<vmem>>, %arg2: memref<32x192xf32, #tpu.memory_space<vmem>>, %arg3: memref<64x32xf32, #tpu.memory_space<vmem>>, %arg4: memref<2x8x32xf32, #tpu.memory_space<vmem>>) attributes {dimension_semantics = [#tpu.dimension_semantics<parallel>], iteration_bounds = array<i64: 1>, scalar_prefetch = 0 : i64, scratch_operands = 0 : i64, tpu.core_type = #tpu.core_type<tc>, window_params = [{transform_indices = @transform_0, window_bounds = array<i64: 2, 8, 32>}, {pipeline_mode = #tpu.pipeline_mode<synchronous>, transform_indices = @transform_1, window_bounds = array<i64: 32, 192>}, {pipeline_mode = #tpu.pipeline_mode<synchronous>, transform_indices = @transform_2, window_bounds = array<i64: 64, 32>}, {transform_indices = @transform_3, window_bounds = array<i64: 2, 8, 32>}]} {
    %c0 = arith.constant 0 : index
    %c0_0 = arith.constant 0 : index
    %c0_1 = arith.constant 0 : index
    %0 = vector.load %arg1[%c0, %c0_0, %c0_1] : memref<2x8x32xf32, #tpu.memory_space<vmem>>, vector<2x8x32xf32>
    %1 = vector.shape_cast %0 : vector<2x8x32xf32> to vector<16x32xf32>
    %c0_2 = arith.constant 0 : index
    %c0_3 = arith.constant 0 : index
    %2 = vector.load %arg2[%c0_2, %c0_3] : memref<32x192xf32, #tpu.memory_space<vmem>>, vector<32x192xf32>
    %cst = arith.constant dense<0.000000e+00> : vector<16x192xf32>
    %3 = tpu.matmul %1, %2, %cst {dimension_numbers = #tpu.dot_dimension_numbers<[1], [0], [0], [1], [0, 0, 1, 1], [], []>} : vector<16x32xf32>, vector<32x192xf32>, vector<16x192xf32> -> vector<16x192xf32>
    %4 = vector.extract_strided_slice %3 {offsets = [0, 0], sizes = [8, 192], strides = [1, 1]} : vector<16x192xf32> to vector<8x192xf32>
    %5 = vector.extract_strided_slice %4 {offsets = [0, 0], sizes = [8, 32], strides = [1, 1]} : vector<8x192xf32> to vector<8x32xf32>
    %6 = vector.extract_strided_slice %4 {offsets = [0, 32], sizes = [8, 32], strides = [1, 1]} : vector<8x192xf32> to vector<8x32xf32>
    %7 = vector.extract_strided_slice %4 {offsets = [0, 64], sizes = [8, 32], strides = [1, 1]} : vector<8x192xf32> to vector<8x32xf32>
    %cst_4 = arith.constant dense<0.000000e+00> : vector<8x8xf32>
    %8 = tpu.matmul %5, %6, %cst_4 {dimension_numbers = #tpu.dot_dimension_numbers<[1], [1], [0], [0], [0, 0, 1, 0], [], []>} : vector<8x32xf32>, vector<8x32xf32>, vector<8x8xf32> -> vector<8x8xf32>
    %cst_5 = arith.constant dense<0xFF800000> : vector<8xf32>
    %9 = vector.multi_reduction <maximumf>, %8, %cst_5 [1] : vector<8x8xf32> to vector<8xf32>
    %10 = vector.shape_cast %9 : vector<8xf32> to vector<8x1xf32>
    %11 = vector.broadcast %10 : vector<8x1xf32> to vector<8x8xf32>
    %12 = arith.subf %8, %11 : vector<8x8xf32>
    %13 = math.exp %12 : vector<8x8xf32>
    %cst_6 = arith.constant dense<0.000000e+00> : vector<8xf32>
    %14 = vector.multi_reduction <add>, %13, %cst_6 [1] : vector<8x8xf32> to vector<8xf32>
    %15 = vector.shape_cast %14 : vector<8xf32> to vector<8x1xf32>
    %cst_7 = arith.constant dense<0.000000e+00> : vector<8x32xf32>
    %16 = tpu.matmul %13, %7, %cst_7 {dimension_numbers = #tpu.dot_dimension_numbers<[1], [0], [0], [1], [0, 0, 1, 1], [], []>} : vector<8x8xf32>, vector<8x32xf32>, vector<8x32xf32> -> vector<8x32xf32>
    %17 = tpu.reciprocal %15 {approx = true} : vector<8x1xf32> -> vector<8x1xf32>
    %18 = vector.broadcast %17 : vector<8x1xf32> to vector<8x32xf32>
    %19 = arith.mulf %16, %18 : vector<8x32xf32>
    %20 = vector.extract_strided_slice %4 {offsets = [0, 96], sizes = [8, 32], strides = [1, 1]} : vector<8x192xf32> to vector<8x32xf32>
    %21 = vector.extract_strided_slice %4 {offsets = [0, 128], sizes = [8, 32], strides = [1, 1]} : vector<8x192xf32> to vector<8x32xf32>
    %22 = vector.extract_strided_slice %4 {offsets = [0, 160], sizes = [8, 32], strides = [1, 1]} : vector<8x192xf32> to vector<8x32xf32>
    %cst_8 = arith.constant dense<0.000000e+00> : vector<8x8xf32>
    %23 = tpu.matmul %20, %21, %cst_8 {dimension_numbers = #tpu.dot_dimension_numbers<[1], [1], [0], [0], [0, 0, 1, 0], [], []>} : vector<8x32xf32>, vector<8x32xf32>, vector<8x8xf32> -> vector<8x8xf32>
    %cst_9 = arith.constant dense<0xFF800000> : vector<8xf32>
    %24 = vector.multi_reduction <maximumf>, %23, %cst_9 [1] : vector<8x8xf32> to vector<8xf32>
    %25 = vector.shape_cast %24 : vector<8xf32> to vector<8x1xf32>
    %26 = vector.broadcast %25 : vector<8x1xf32> to vector<8x8xf32>
    %27 = arith.subf %23, %26 : vector<8x8xf32>
    %28 = math.exp %27 : vector<8x8xf32>
    %cst_10 = arith.constant dense<0.000000e+00> : vector<8xf32>
    %29 = vector.multi_reduction <add>, %28, %cst_10 [1] : vector<8x8xf32> to vector<8xf32>
    %30 = vector.shape_cast %29 : vector<8xf32> to vector<8x1xf32>
    %cst_11 = arith.constant dense<0.000000e+00> : vector<8x32xf32>
    %31 = tpu.matmul %28, %22, %cst_11 {dimension_numbers = #tpu.dot_dimension_numbers<[1], [0], [0], [1], [0, 0, 1, 1], [], []>} : vector<8x8xf32>, vector<8x32xf32>, vector<8x32xf32> -> vector<8x32xf32>
    %32 = tpu.reciprocal %30 {approx = true} : vector<8x1xf32> -> vector<8x1xf32>
    %33 = vector.broadcast %32 : vector<8x1xf32> to vector<8x32xf32>
    %34 = arith.mulf %31, %33 : vector<8x32xf32>
    %35 = tpu.concatenate %19, %34 in 1 : vector<8x32xf32>, vector<8x32xf32> -> vector<8x64xf32>
    %36 = vector.extract_strided_slice %3 {offsets = [8, 0], sizes = [8, 192], strides = [1, 1]} : vector<16x192xf32> to vector<8x192xf32>
    %37 = vector.extract_strided_slice %36 {offsets = [0, 0], sizes = [8, 32], strides = [1, 1]} : vector<8x192xf32> to vector<8x32xf32>
    %38 = vector.extract_strided_slice %36 {offsets = [0, 32], sizes = [8, 32], strides = [1, 1]} : vector<8x192xf32> to vector<8x32xf32>
    %39 = vector.extract_strided_slice %36 {offsets = [0, 64], sizes = [8, 32], strides = [1, 1]} : vector<8x192xf32> to vector<8x32xf32>
    %cst_12 = arith.constant dense<0.000000e+00> : vector<8x8xf32>
    %40 = tpu.matmul %37, %38, %cst_12 {dimension_numbers = #tpu.dot_dimension_numbers<[1], [1], [0], [0], [0, 0, 1, 0], [], []>} : vector<8x32xf32>, vector<8x32xf32>, vector<8x8xf32> -> vector<8x8xf32>
    %cst_13 = arith.constant dense<0xFF800000> : vector<8xf32>
    %41 = vector.multi_reduction <maximumf>, %40, %cst_13 [1] : vector<8x8xf32> to vector<8xf32>
    %42 = vector.shape_cast %41 : vector<8xf32> to vector<8x1xf32>
    %43 = vector.broadcast %42 : vector<8x1xf32> to vector<8x8xf32>
    %44 = arith.subf %40, %43 : vector<8x8xf32>
    %45 = math.exp %44 : vector<8x8xf32>
    %cst_14 = arith.constant dense<0.000000e+00> : vector<8xf32>
    %46 = vector.multi_reduction <add>, %45, %cst_14 [1] : vector<8x8xf32> to vector<8xf32>
    %47 = vector.shape_cast %46 : vector<8xf32> to vector<8x1xf32>
    %cst_15 = arith.constant dense<0.000000e+00> : vector<8x32xf32>
    %48 = tpu.matmul %45, %39, %cst_15 {dimension_numbers = #tpu.dot_dimension_numbers<[1], [0], [0], [1], [0, 0, 1, 1], [], []>} : vector<8x8xf32>, vector<8x32xf32>, vector<8x32xf32> -> vector<8x32xf32>
    %49 = tpu.reciprocal %47 {approx = true} : vector<8x1xf32> -> vector<8x1xf32>
    %50 = vector.broadcast %49 : vector<8x1xf32> to vector<8x32xf32>
    %51 = arith.mulf %48, %50 : vector<8x32xf32>
    %52 = vector.extract_strided_slice %36 {offsets = [0, 96], sizes = [8, 32], strides = [1, 1]} : vector<8x192xf32> to vector<8x32xf32>
    %53 = vector.extract_strided_slice %36 {offsets = [0, 128], sizes = [8, 32], strides = [1, 1]} : vector<8x192xf32> to vector<8x32xf32>
    %54 = vector.extract_strided_slice %36 {offsets = [0, 160], sizes = [8, 32], strides = [1, 1]} : vector<8x192xf32> to vector<8x32xf32>
    %cst_16 = arith.constant dense<0.000000e+00> : vector<8x8xf32>
    %55 = tpu.matmul %52, %53, %cst_16 {dimension_numbers = #tpu.dot_dimension_numbers<[1], [1], [0], [0], [0, 0, 1, 0], [], []>} : vector<8x32xf32>, vector<8x32xf32>, vector<8x8xf32> -> vector<8x8xf32>
    %cst_17 = arith.constant dense<0xFF800000> : vector<8xf32>
    %56 = vector.multi_reduction <maximumf>, %55, %cst_17 [1] : vector<8x8xf32> to vector<8xf32>
    %57 = vector.shape_cast %56 : vector<8xf32> to vector<8x1xf32>
    %58 = vector.broadcast %57 : vector<8x1xf32> to vector<8x8xf32>
    %59 = arith.subf %55, %58 : vector<8x8xf32>
    %60 = math.exp %59 : vector<8x8xf32>
    %cst_18 = arith.constant dense<0.000000e+00> : vector<8xf32>
    %61 = vector.multi_reduction <add>, %60, %cst_18 [1] : vector<8x8xf32> to vector<8xf32>
    %62 = vector.shape_cast %61 : vector<8xf32> to vector<8x1xf32>
    %cst_19 = arith.constant dense<0.000000e+00> : vector<8x32xf32>
    %63 = tpu.matmul %60, %54, %cst_19 {dimension_numbers = #tpu.dot_dimension_numbers<[1], [0], [0], [1], [0, 0, 1, 1], [], []>} : vector<8x8xf32>, vector<8x32xf32>, vector<8x32xf32> -> vector<8x32xf32>
    %64 = tpu.reciprocal %62 {approx = true} : vector<8x1xf32> -> vector<8x1xf32>
    %65 = vector.broadcast %64 : vector<8x1xf32> to vector<8x32xf32>
    %66 = arith.mulf %63, %65 : vector<8x32xf32>
    %67 = tpu.concatenate %51, %66 in 1 : vector<8x32xf32>, vector<8x32xf32> -> vector<8x64xf32>
    %68 = tpu.concatenate %35, %67 in 0 : vector<8x64xf32>, vector<8x64xf32> -> vector<16x64xf32>
    %c0_20 = arith.constant 0 : index
    %c0_21 = arith.constant 0 : index
    %69 = vector.load %arg3[%c0_20, %c0_21] : memref<64x32xf32, #tpu.memory_space<vmem>>, vector<64x32xf32>
    %cst_22 = arith.constant dense<0.000000e+00> : vector<16x32xf32>
    %70 = tpu.matmul %68, %69, %cst_22 {dimension_numbers = #tpu.dot_dimension_numbers<[1], [0], [0], [1], [0, 0, 1, 1], [], []>} : vector<16x64xf32>, vector<64x32xf32>, vector<16x32xf32> -> vector<16x32xf32>
    %71 = vector.shape_cast %70 : vector<16x32xf32> to vector<2x8x32xf32>
    %c0_23 = arith.constant 0 : index
    %c0_24 = arith.constant 0 : index
    %c0_25 = arith.constant 0 : index
    %72 = vector.load %arg4[%c0_23, %c0_24, %c0_25] : memref<2x8x32xf32, #tpu.memory_space<vmem>>, vector<2x8x32xf32>
    tpu.vector_store %arg4[%c0_23, %c0_24, %c0_25], %71 {strides = array<i32>} : memref<2x8x32xf32, #tpu.memory_space<vmem>>, vector<2x8x32xf32>,
    return
  }
  func.func @transform_0(%arg0: i32) -> (i32, i32, i32) {
    %c0_i32 = arith.constant 0 : i32
    %c0_i32_0 = arith.constant 0 : i32
    %c0_i32_1 = arith.constant 0 : i32
    return %arg0, %c0_i32, %c0_i32_0 : i32, i32, i32
  }
  func.func @transform_1(%arg0: i32) -> (i32, i32) {
    %c0_i32 = arith.constant 0 : i32
    %c0_i32_0 = arith.constant 0 : i32
    %c0_i32_1 = arith.constant 0 : i32
    return %c0_i32, %c0_i32_0 : i32, i32
  }
  func.func @transform_2(%arg0: i32) -> (i32, i32) {
    %c0_i32 = arith.constant 0 : i32
    %c0_i32_0 = arith.constant 0 : i32
    %c0_i32_1 = arith.constant 0 : i32
    return %c0_i32, %c0_i32_0 : i32, i32
  }
  func.func @transform_3(%arg0: i32) -> (i32, i32, i32) {
    %c0_i32 = arith.constant 0 : i32
    %c0_i32_0 = arith.constant 0 : i32
    %c0_i32_1 = arith.constant 0 : i32
    return %arg0, %c0_i32, %c0_i32_0 : i32, i32, i32
  }
}

</mosaic_0001>

<llo_original>
// kernel: tpu_custom_call.1
$region0: #{tpu_custom_call.1}
  #allocation0 [shape = 'u32[]', space=smem, size = 0x4, offset = 0x4, fixed_abs, tag = 'smem constant byte address 0x4 - core index']
  #allocation1 [shape = 'u32[144,128]{1,0:T(1,128)}', space=vmem, size = 0x12000, scoped, tag = 'internal scratch']
  %s0 = inlined_call_operand.vmem [shape: f32[2,8,32], index: 0, kind: input, shape index: {}]
  %s1 = inlined_call_operand.vmem [shape: f32[32,192], index: 1, kind: input, shape index: {}]
  %s2 = inlined_call_operand.vmem [shape: f32[64,32], index: 2, kind: input, shape index: {}]
  %s3 = inlined_call_operand.hbm [shape: f32[2,8,32], index: 3, kind: output, shape index: {}]
  %s4 = sld [smem:[#allocation0]]
  $region22: #{tpu_custom_call.1} parent=0
    _
  %s6 = ssub.s32 1, %s4
  %s7 = scalar_select 0, %s6, %s4
  $region1: #{tpu_custom_call.1} parent=0
    #allocation2 [shape = 'u8[8192]{0}', space=vmem, size = 0x2000, scoped, tag = 'output window, operand 0, single buffered']
    #allocation3 [shape = 's32[1]{0}', space=sflag, size = 0x4, scoped, tag = 'scoped memory for tpu_custom_call.1']
    %8 = vsyncpa [#allocation3], 0
    // Predicated region
    $region2: #{tpu_custom_call.1} parent=1 // pred_check
      _
    $region3: #{tpu_custom_call.1} parent=1 // pred_check_branch
      %10 = sbr.rel (0) target = $region5
    $region4: #{tpu_custom_call.1} parent=1 // pred_region
      _
    $region5: #{tpu_custom_call.1} parent=1 // pred_fallthru
      _
    // Predicated region
    $region6: #{tpu_custom_call.1} parent=1 // pred_check
      _
    $region7: #{tpu_custom_call.1} parent=1 // pred_check_branch
      %12 = sbr.rel (0) target = $region9
    $region8: #{tpu_custom_call.1} parent=1 // pred_region
      _
    $region9: #{tpu_custom_call.1} parent=1 // pred_fallthru
      _
    // Predicated region
    $region10: #{tpu_custom_call.1} parent=1 // pred_check
      _
    $region11: #{tpu_custom_call.1} parent=1 // pred_check_branch
      %14 = sbr.rel (0) target = $region13
    $region12: #{tpu_custom_call.1} parent=1 // pred_region
      _
    $region13: #{tpu_custom_call.1} parent=1 // pred_fallthru
      _
    %v15 = vld [vmem:[%s0] sm:$0xff]
    %v16 = vld [vmem:[%s0 + $0x8] sm:$0xff]
    %v17 = vld [vmem:[%s1] sm:$0xff]
    %v18 = vld [vmem:[%s1 + $0x8] sm:$0xff]
    %v19 = vld [vmem:[%s1 + $0x10] sm:$0xff]
    %v20 = vld [vmem:[%s1 + $0x18] sm:$0xff]
    %v21 = vld [vmem:[%s1 + $0x20] sm:$0xff]
    %v22 = vld [vmem:[%s1 + $0x28] sm:$0xff]
    %v23 = vld [vmem:[%s1 + $0x30] sm:$0xff]
    %v24 = vld [vmem:[%s1 + $0x38] sm:$0xff]
    %vm25 = vcmask 261120
    %v27 = vsel %vm25, %v15, 0
    %v30 = vsel %vm25, %v16, 0
    %32 = vmatprep.subr.mxu0 %v18
    %33 = vmatpush1.msra.mxu0 %v17
    %34 = vmatprep.subr.mxu0 %v20
    %35 = vmatpush1.msra.mxu0 %v19
    %36 = vmatprep.subr.mxu0 %v22
    %37 = vmatpush1.msra.mxu0 %v21
    %38 = vmatprep.subr.mxu0 %v24
    %39 = vmatpush1.msra.mxu0 %v23
    %40 = vmatprep.subr.mxu0 0.0
    %41 = vmatpush1.msra.mxu0 0.0
    %42 = vmatprep.subr.mxu0 0.0
    %43 = vmatpush1.msra.mxu0 0.0
    %44 = vmatprep.subr.mxu0 0.0
    %45 = vmatpush1.msra.mxu0 0.0
    %46 = vmatprep.subr.mxu0 0.0
    %47 = vmatpush1.msra.mxu0 0.0
    %48 = vmatprep.subr.mxu0 0.0
    %49 = vmatpush1.msra.mxu0 0.0
    %50 = vmatprep.subr.mxu0 0.0
    %51 = vmatpush1.msra.mxu0 0.0
    %52 = vmatprep.subr.mxu0 0.0
    %53 = vmatpush1.msra.mxu0 0.0
    %54 = vmatprep.subr.mxu0 0.0
    %55 = vmatpush1.msra.mxu0 0.0
    %56 = vmatprep.subr.mxu0 0.0
    %57 = vmatpush1.msra.mxu0 0.0
    %58 = vmatprep.subr.mxu0 0.0
    %59 = vmatpush1.msra.mxu0 0.0
    %60 = vmatprep.subr.mxu0 0.0
    %61 = vmatpush1.msra.mxu0 0.0
    %62 = vmatprep.subr.mxu0 0.0
    %63 = vmatpush1.msra.mxu0 0.0
    %64 = vmatprep.subr.mxu0 0.0
    %65 = vmatpush1.msra.mxu0 0.0
    %66 = vmatprep.subr.mxu0 0.0
    %67 = vmatpush1.msra.mxu0 0.0
    %68 = vmatprep.subr.mxu0 0.0
    %69 = vmatpush1.msra.mxu0 0.0
    %70 = vmatprep.subr.mxu0 0.0
    %71 = vmatpush1.msra.mxu0 0.0
    %72 = vmatprep.subr.mxu0 0.0
    %73 = vmatpush1.msra.mxu0 0.0
    %74 = vmatprep.subr.mxu0 0.0
    %75 = vmatpush1.msra.mxu0 0.0
    %76 = vmatprep.subr.mxu0 0.0
    %77 = vmatpush1.msra.mxu0 0.0
    %78 = vmatprep.subr.mxu0 0.0
    %79 = vmatpush1.msra.mxu0 0.0
    %80 = vmatprep.subr.mxu0 0.0
    %81 = vmatpush1.msra.mxu0 0.0
    %82 = vmatprep.subr.mxu0 0.0
    %83 = vmatpush1.msra.mxu0 0.0
    %84 = vmatprep.subr.mxu0 0.0
    %85 = vmatpush1.msra.mxu0 0.0
    %86 = vmatprep.subr.mxu0 0.0
    %87 = vmatpush1.msra.mxu0 0.0
    %88 = vmatprep.subr.mxu0 0.0
    %89 = vmatpush1.msra.mxu0 0.0
    %90 = vmatprep.subr.mxu0 0.0
    %91 = vmatpush1.msra.mxu0 0.0
    %92 = vmatprep.subr.mxu0 0.0
    %93 = vmatpush1.msra.mxu0 0.0
    %94 = vmatprep.subr.mxu0 0.0
    %95 = vmatpush1.msra.mxu0 0.0
    %96 = vmatprep.mubr.f32.mxu0 0.0
    %97 = vmatmul.mubr.f32.gmra.mrb[0].mxu0 %v27
    %v98 = vpop.f32.mrb[0].mxu0
    %v99 = vadd.f32 0.0, %v98
    %v100 = vpop.f32.mrb[0].mxu0
    %v101 = vadd.f32 0.0, %v100
    %102 = vmatprep.mubr.f32.mxu0 0.0
    %103 = vmatmul.mubr.f32.gmra.mrb[0].mxu0 %v30
    %v104 = vpop.f32.mrb[0].mxu0
    %v105 = vadd.f32 0.0, %v104
    %v106 = vpop.f32.mrb[0].mxu0
    %v107 = vadd.f32 0.0, %v106
    %108 = vdwg.mxu0
    %110 = vrot.lane.b32.xlu0 %v99, 96
    %v111 = vpop.permute.xlu0 %110
    %v112 = vsel %vm25, %v99, 0
    %v114 = vsel %vm25, %v111, 0
    %116 = vmatprep.subr.mxu0 0.0
    %117 = vmatpush1.xpose.msra.mxu0 %v114
    %118 = vmatprep.subr.mxu0 0.0
    %119 = vmatpush1.xpose.msra.mxu0 0.0
    %120 = vmatprep.subr.mxu0 0.0
    %121 = vmatpush1.xpose.msra.mxu0 0.0
    %122 = vmatprep.subr.mxu0 0.0
    %123 = vmatpush1.xpose.msra.mxu0 0.0
    %124 = vmatprep.subr.mxu0 0.0
    %125 = vmatpush1.xpose.msra.mxu0 0.0
    %126 = vmatprep.subr.mxu0 0.0
    %127 = vmatpush1.xpose.msra.mxu0 0.0
    %128 = vmatprep.subr.mxu0 0.0
    %129 = vmatpush1.xpose.msra.mxu0 0.0
    %130 = vmatprep.subr.mxu0 0.0
    %131 = vmatpush1.xpose.msra.mxu0 0.0
    %132 = vmatprep.subr.mxu0 0.0
    %133 = vmatpush1.xpose.msra.mxu0 0.0
    %134 = vmatprep.subr.mxu0 0.0
    %135 = vmatpush1.xpose.msra.mxu0 0.0
    %136 = vmatprep.subr.mxu0 0.0
    %137 = vmatpush1.xpose.msra.mxu0 0.0
    %138 = vmatprep.subr.mxu0 0.0
    %139 = vmatpush1.xpose.msra.mxu0 0.0
    %140 = vmatprep.subr.mxu0 0.0
    %141 = vmatpush1.xpose.msra.mxu0 0.0
    %142 = vmatprep.subr.mxu0 0.0
    %143 = vmatpush1.xpose.msra.mxu0 0.0
    %144 = vmatprep.subr.mxu0 0.0
    %145 = vmatpush1.xpose.msra.mxu0 0.0
    %146 = vmatprep.subr.mxu0 0.0
    %147 = vmatpush1.xpose.msra.mxu0 0.0
    %148 = vmatprep.subr.mxu0 0.0
    %149 = vmatpush1.xpose.msra.mxu0 0.0
    %150 = vmatprep.subr.mxu0 0.0
    %151 = vmatpush1.xpose.msra.mxu0 0.0
    %152 = vmatprep.subr.mxu0 0.0
    %153 = vmatpush1.xpose.msra.mxu0 0.0
    %154 = vmatprep.subr.mxu0 0.0
    %155 = vmatpush1.xpose.msra.mxu0 0.0
    %156 = vmatprep.subr.mxu0 0.0
    %157 = vmatpush1.xpose.msra.mxu0 0.0
    %158 = vmatprep.subr.mxu0 0.0
    %159 = vmatpush1.xpose.msra.mxu0 0.0
    %160 = vmatprep.subr.mxu0 0.0
    %161 = vmatpush1.xpose.msra.mxu0 0.0
    %162 = vmatprep.subr.mxu0 0.0
    %163 = vmatpush1.xpose.msra.mxu0 0.0
    %164 = vmatprep.subr.mxu0 0.0
    %165 = vmatpush1.xpose.msra.mxu0 0.0
    %166 = vmatprep.subr.mxu0 0.0
    %167 = vmatpush1.xpose.msra.mxu0 0.0
    %168 = vmatprep.subr.mxu0 0.0
    %169 = vmatpush1.xpose.msra.mxu0 0.0
    %170 = vmatprep.subr.mxu0 0.0
    %171 = vmatpush1.xpose.msra.mxu0 0.0
    %172 = vmatprep.subr.mxu0 0.0
    %173 = vmatpush1.xpose.msra.mxu0 0.0
    %174 = vmatprep.subr.mxu0 0.0
    %175 = vmatpush1.xpose.msra.mxu0 0.0
    %176 = vmatprep.subr.mxu0 0.0
    %177 = vmatpush1.xpose.msra.mxu0 0.0
    %178 = vmatprep.subr.mxu0 0.0
    %179 = vmatpush1.xpose.msra.mxu0 0.0
    %180 = vmatprep.mubr.f32.mxu0 0.0
    %181 = vmatmul.mubr.f32.gmra.mrb[0].mxu0 %v112
    %v182 = vpop.f32.mrb[0].mxu0
    %v183 = vadd.f32 0.0, %v182
    %v184 = vpop.f32.mrb[0].mxu0
    %185 = vdwg.mxu0
    %vm186 = vcmask 64512
    %v187 = vsel %vm186, %v183, -inf
    %188 = vmax.xlane.f32.xlu0 %v187
    %v189 = vpop.xlane.xlu0 %188
    %v190 = vsub.f32 %v183, %v189
    %v191 = vmul.f32 %v190, 1.442695
    %v192 = vpow.pop %v191
    %v193 = vsel %vm186, %v192, 0.0
    %194 = vadd.xlane.f32.xlu0 %v193
    %v195 = vpop.xlane.xlu0 %194
    %196 = vrot.lane.b32.xlu0 %v99, 64
    %v197 = vpop.permute.xlu0 %196
    %v200 = vsel %vm186, %v192, 0
    %202 = vmatprep.subr.mxu0 0.0
    %203 = vmatpush1.msra.mxu0 %v197
    %204 = vmatprep.subr.mxu0 0.0
    %205 = vmatpush1.msra.mxu0 0.0
    %206 = vmatprep.subr.mxu0 0.0
    %207 = vmatpush1.msra.mxu0 0.0
    %208 = vmatprep.subr.mxu0 0.0
    %209 = vmatpush1.msra.mxu0 0.0
    %210 = vmatprep.subr.mxu0 0.0
    %211 = vmatpush1.msra.mxu0 0.0
    %212 = vmatprep.subr.mxu0 0.0
    %213 = vmatpush1.msra.mxu0 0.0
    %214 = vmatprep.subr.mxu0 0.0
    %215 = vmatpush1.msra.mxu0 0.0
    %216 = vmatprep.subr.mxu0 0.0
    %217 = vmatpush1.msra.mxu0 0.0
    %218 = vmatprep.subr.mxu0 0.0
    %219 = vmatpush1.msra.mxu0 0.0
    %220 = vmatprep.subr.mxu0 0.0
    %221 = vmatpush1.msra.mxu0 0.0
    %222 = vmatprep.subr.mxu0 0.0
    %223 = vmatpush1.msra.mxu0 0.0
    %224 = vmatprep.subr.mxu0 0.0
    %225 = vmatpush1.msra.mxu0 0.0
    %226 = vmatprep.subr.mxu0 0.0
    %227 = vmatpush1.msra.mxu0 0.0
    %228 = vmatprep.subr.mxu0 0.0
    %229 = vmatpush1.msra.mxu0 0.0
    %230 = vmatprep.subr.mxu0 0.0
    %231 = vmatpush1.msra.mxu0 0.0
    %232 = vmatprep.subr.mxu0 0.0
    %233 = vmatpush1.msra.mxu0 0.0
    %234 = vmatprep.subr.mxu0 0.0
    %235 = vmatpush1.msra.mxu0 0.0
    %236 = vmatprep.subr.mxu0 0.0
    %237 = vmatpush1.msra.mxu0 0.0
    %238 = vmatprep.subr.mxu0 0.0
    %239 = vmatpush1.msra.mxu0 0.0
    %240 = vmatprep.subr.mxu0 0.0
    %241 = vmatpush1.msra.mxu0 0.0
    %242 = vmatprep.subr.mxu0 0.0
    %243 = vmatpush1.msra.mxu0 0.0
    %244 = vmatprep.subr.mxu0 0.0
    %245 = vmatpush1.msra.mxu0 0.0
    %246 = vmatprep.subr.mxu0 0.0
    %247 = vmatpush1.msra.mxu0 0.0
    %248 = vmatprep.subr.mxu0 0.0
    %249 = vmatpush1.msra.mxu0 0.0
    %250 = vmatprep.subr.mxu0 0.0
    %251 = vmatpush1.msra.mxu0 0.0
    %252 = vmatprep.subr.mxu0 0.0
    %253 = vmatpush1.msra.mxu0 0.0
    %254 = vmatprep.subr.mxu0 0.0
    %255 = vmatpush1.msra.mxu0 0.0
    %256 = vmatprep.subr.mxu0 0.0
    %257 = vmatpush1.msra.mxu0 0.0
    %258 = vmatprep.subr.mxu0 0.0
    %259 = vmatpush1.msra.mxu0 0.0
    %260 = vmatprep.subr.mxu0 0.0
    %261 = vmatpush1.msra.mxu0 0.0
    %262 = vmatprep.subr.mxu0 0.0
    %263 = vmatpush1.msra.mxu0 0.0
    %264 = vmatprep.subr.mxu0 0.0
    %265 = vmatpush1.msra.mxu0 0.0
    %266 = vmatprep.mubr.f32.mxu0 0.0
    %267 = vmatmul.mubr.f32.gmra.mrb[0].mxu0 %v200
    %v268 = vpop.f32.mrb[0].mxu0
    %v269 = vadd.f32 0.0, %v268
    %v270 = vpop.f32.mrb[0].mxu0
    %271 = vdwg.mxu0
    %v272 = vrcp.pop %v195
    %v273 = vmul.f32 %v269, %v272
    %274 = vrot.lane.b32.xlu0 %v99, 32
    %v275 = vpop.permute.xlu0 %274
    %v276 = vsel %vm25, %v275, 0
    %v279 = vsel %vm25, %v101, 0
    %281 = vmatprep.subr.mxu0 0.0
    %282 = vmatpush1.xpose.msra.mxu0 %v279
    %283 = vmatprep.subr.mxu0 0.0
    %284 = vmatpush1.xpose.msra.mxu0 0.0
    %285 = vmatprep.subr.mxu0 0.0
    %286 = vmatpush1.xpose.msra.mxu0 0.0
    %287 = vmatprep.subr.mxu0 0.0
    %288 = vmatpush1.xpose.msra.mxu0 0.0
    %289 = vmatprep.subr.mxu0 0.0
    %290 = vmatpush1.xpose.msra.mxu0 0.0
    %291 = vmatprep.subr.mxu0 0.0
    %292 = vmatpush1.xpose.msra.mxu0 0.0
    %293 = vmatprep.subr.mxu0 0.0
    %294 = vmatpush1.xpose.msra.mxu0 0.0
    %295 = vmatprep.subr.mxu0 0.0
    %296 = vmatpush1.xpose.msra.mxu0 0.0
    %297 = vmatprep.subr.mxu0 0.0
    %298 = vmatpush1.xpose.msra.mxu0 0.0
    %299 = vmatprep.subr.mxu0 0.0
    %300 = vmatpush1.xpose.msra.mxu0 0.0
    %301 = vmatprep.subr.mxu0 0.0
    %302 = vmatpush1.xpose.msra.mxu0 0.0
    %303 = vmatprep.subr.mxu0 0.0
    %304 = vmatpush1.xpose.msra.mxu0 0.0
    %305 = vmatprep.subr.mxu0 0.0
    %306 = vmatpush1.xpose.msra.mxu0 0.0
    %307 = vmatprep.subr.mxu0 0.0
    %308 = vmatpush1.xpose.msra.mxu0 0.0
    %309 = vmatprep.subr.mxu0 0.0
    %310 = vmatpush1.xpose.msra.mxu0 0.0
    %311 = vmatprep.subr.mxu0 0.0
    %312 = vmatpush1.xpose.msra.mxu0 0.0
    %313 = vmatprep.subr.mxu0 0.0
    %314 = vmatpush1.xpose.msra.mxu0 0.0
    %315 = vmatprep.subr.mxu0 0.0
    %316 = vmatpush1.xpose.msra.mxu0 0.0
    %317 = vmatprep.subr.mxu0 0.0
    %318 = vmatpush1.xpose.msra.mxu0 0.0
    %319 = vmatprep.subr.mxu0 0.0
    %320 = vmatpush1.xpose.msra.mxu0 0.0
    %321 = vmatprep.subr.mxu0 0.0
    %322 = vmatpush1.xpose.msra.mxu0 0.0
    %323 = vmatprep.subr.mxu0 0.0
    %324 = vmatpush1.xpose.msra.mxu0 0.0
    %325 = vmatprep.subr.mxu0 0.0
    %326 = vmatpush1.xpose.msra.mxu0 0.0
    %327 = vmatprep.subr.mxu0 0.0
    %328 = vmatpush1.xpose.msra.mxu0 0.0
    %329 = vmatprep.subr.mxu0 0.0
    %330 = vmatpush1.xpose.msra.mxu0 0.0
    %331 = vmatprep.subr.mxu0 0.0
    %332 = vmatpush1.xpose.msra.mxu0 0.0
    %333 = vmatprep.subr.mxu0 0.0
    %334 = vmatpush1.xpose.msra.mxu0 0.0
    %335 = vmatprep.subr.mxu0 0.0
    %336 = vmatpush1.xpose.msra.mxu0 0.0
    %337 = vmatprep.subr.mxu0 0.0
    %338 = vmatpush1.xpose.msra.mxu0 0.0
    %339 = vmatprep.subr.mxu0 0.0
    %340 = vmatpush1.xpose.msra.mxu0 0.0
    %341 = vmatprep.subr.mxu0 0.0
    %342 = vmatpush1.xpose.msra.mxu0 0.0
    %343 = vmatprep.subr.mxu0 0.0
    %344 = vmatpush1.xpose.msra.mxu0 0.0
    %345 = vmatprep.mubr.f32.mxu0 0.0
    %346 = vmatmul.mubr.f32.gmra.mrb[0].mxu0 %v276
    %v347 = vpop.f32.mrb[0].mxu0
    %v348 = vadd.f32 0.0, %v347
    %v349 = vpop.f32.mrb[0].mxu0
    %350 = vdwg.mxu0
    %v351 = vsel %vm186, %v348, -inf
    %352 = vmax.xlane.f32.xlu0 %v351
    %v353 = vpop.xlane.xlu0 %352
    %v354 = vsub.f32 %v348, %v353
    %v355 = vmul.f32 %v354, 1.442695
    %v356 = vpow.pop %v355
    %v357 = vsel %vm186, %v356, 0.0
    %358 = vadd.xlane.f32.xlu0 %v357
    %v359 = vpop.xlane.xlu0 %358
    %360 = vrot.lane.b32.xlu0 %v101, 96
    %v361 = vpop.permute.xlu0 %360
    %v364 = vsel %vm186, %v356, 0
    %366 = vmatprep.subr.mxu0 0.0
    %367 = vmatpush1.msra.mxu0 %v361
    %368 = vmatprep.subr.mxu0 0.0
    %369 = vmatpush1.msra.mxu0 0.0
    %370 = vmatprep.subr.mxu0 0.0
    %371 = vmatpush1.msra.mxu0 0.0
    %372 = vmatprep.subr.mxu0 0.0
    %373 = vmatpush1.msra.mxu0 0.0
    %374 = vmatprep.subr.mxu0 0.0
    %375 = vmatpush1.msra.mxu0 0.0
    %376 = vmatprep.subr.mxu0 0.0
    %377 = vmatpush1.msra.mxu0 0.0
    %378 = vmatprep.subr.mxu0 0.0
    %379 = vmatpush1.msra.mxu0 0.0
    %380 = vmatprep.subr.mxu0 0.0
    %381 = vmatpush1.msra.mxu0 0.0
    %382 = vmatprep.subr.mxu0 0.0
    %383 = vmatpush1.msra.mxu0 0.0
    %384 = vmatprep.subr.mxu0 0.0
    %385 = vmatpush1.msra.mxu0 0.0
    %386 = vmatprep.subr.mxu0 0.0
    %387 = vmatpush1.msra.mxu0 0.0
    %388 = vmatprep.subr.mxu0 0.0
    %389 = vmatpush1.msra.mxu0 0.0
    %390 = vmatprep.subr.mxu0 0.0
    %391 = vmatpush1.msra.mxu0 0.0
    %392 = vmatprep.subr.mxu0 0.0
    %393 = vmatpush1.msra.mxu0 0.0
    %394 = vmatprep.subr.mxu0 0.0
    %395 = vmatpush1.msra.mxu0 0.0
    %396 = vmatprep.subr.mxu0 0.0
    %397 = vmatpush1.msra.mxu0 0.0
    %398 = vmatprep.subr.mxu0 0.0
    %399 = vmatpush1.msra.mxu0 0.0
    %400 = vmatprep.subr.mxu0 0.0
    %401 = vmatpush1.msra.mxu0 0.0
    %402 = vmatprep.subr.mxu0 0.0
    %403 = vmatpush1.msra.mxu0 0.0
    %404 = vmatprep.subr.mxu0 0.0
    %405 = vmatpush1.msra.mxu0 0.0
    %406 = vmatprep.subr.mxu0 0.0
    %407 = vmatpush1.msra.mxu0 0.0
    %408 = vmatprep.subr.mxu0 0.0
    %409 = vmatpush1.msra.mxu0 0.0
    %410 = vmatprep.subr.mxu0 0.0
    %411 = vmatpush1.msra.mxu0 0.0
    %412 = vmatprep.subr.mxu0 0.0
    %413 = vmatpush1.msra.mxu0 0.0
    %414 = vmatprep.subr.mxu0 0.0
    %415 = vmatpush1.msra.mxu0 0.0
    %416 = vmatprep.subr.mxu0 0.0
    %417 = vmatpush1.msra.mxu0 0.0
    %418 = vmatprep.subr.mxu0 0.0
    %419 = vmatpush1.msra.mxu0 0.0
    %420 = vmatprep.subr.mxu0 0.0
    %421 = vmatpush1.msra.mxu0 0.0
    %422 = vmatprep.subr.mxu0 0.0
    %423 = vmatpush1.msra.mxu0 0.0
    %424 = vmatprep.subr.mxu0 0.0
    %425 = vmatpush1.msra.mxu0 0.0
    %426 = vmatprep.subr.mxu0 0.0
    %427 = vmatpush1.msra.mxu0 0.0
    %428 = vmatprep.subr.mxu0 0.0
    %429 = vmatpush1.msra.mxu0 0.0
    %430 = vmatprep.mubr.f32.mxu0 0.0
    %431 = vmatmul.mubr.f32.gmra.mrb[0].mxu0 %v364
    %v432 = vpop.f32.mrb[0].mxu0
    %v433 = vadd.f32 0.0, %v432
    %v434 = vpop.f32.mrb[0].mxu0
    %435 = vdwg.mxu0
    %v436 = vrcp.pop %v359
    %v437 = vmul.f32 %v433, %v436
    %439 = vrot.lane.b32.xlu0 %v437, 32
    %v440 = vpop.permute.xlu0 %439
    %v442 = vsel %vm25, %v273, %v440
    %444 = vrot.lane.b32.xlu0 %v105, 96
    %v445 = vpop.permute.xlu0 %444
    %v446 = vsel %vm25, %v105, 0
    %v448 = vsel %vm25, %v445, 0
    %450 = vmatprep.subr.mxu0 0.0
    %451 = vmatpush1.xpose.msra.mxu0 %v448
    %452 = vmatprep.subr.mxu0 0.0
    %453 = vmatpush1.xpose.msra.mxu0 0.0
    %454 = vmatprep.subr.mxu0 0.0
    %455 = vmatpush1.xpose.msra.mxu0 0.0
    %456 = vmatprep.subr.mxu0 0.0
    %457 = vmatpush1.xpose.msra.mxu0 0.0
    %458 = vmatprep.subr.mxu0 0.0
    %459 = vmatpush1.xpose.msra.mxu0 0.0
    %460 = vmatprep.subr.mxu0 0.0
    %461 = vmatpush1.xpose.msra.mxu0 0.0
    %462 = vmatprep.subr.mxu0 0.0
    %463 = vmatpush1.xpose.msra.mxu0 0.0
    %464 = vmatprep.subr.mxu0 0.0
    %465 = vmatpush1.xpose.msra.mxu0 0.0
    %466 = vmatprep.subr.mxu0 0.0
    %467 = vmatpush1.xpose.msra.mxu0 0.0
    %468 = vmatprep.subr.mxu0 0.0
    %469 = vmatpush1.xpose.msra.mxu0 0.0
    %470 = vmatprep.subr.mxu0 0.0
    %471 = vmatpush1.xpose.msra.mxu0 0.0
    %472 = vmatprep.subr.mxu0 0.0
    %473 = vmatpush1.xpose.msra.mxu0 0.0
    %474 = vmatprep.subr.mxu0 0.0
    %475 = vmatpush1.xpose.msra.mxu0 0.0
    %476 = vmatprep.subr.mxu0 0.0
    %477 = vmatpush1.xpose.msra.mxu0 0.0
    %478 = vmatprep.subr.mxu0 0.0
    %479 = vmatpush1.xpose.msra.mxu0 0.0
    %480 = vmatprep.subr.mxu0 0.0
    %481 = vmatpush1.xpose.msra.mxu0 0.0
    %482 = vmatprep.subr.mxu0 0.0
    %483 = vmatpush1.xpose.msra.mxu0 0.0
    %484 = vmatprep.subr.mxu0 0.0
    %485 = vmatpush1.xpose.msra.mxu0 0.0
    %486 = vmatprep.subr.mxu0 0.0
    %487 = vmatpush1.xpose.msra.mxu0 0.0
    %488 = vmatprep.subr.mxu0 0.0
    %489 = vmatpush1.xpose.msra.mxu0 0.0
    %490 = vmatprep.subr.mxu0 0.0
    %491 = vmatpush1.xpose.msra.mxu0 0.0
    %492 = vmatprep.subr.mxu0 0.0
    %493 = vmatpush1.xpose.msra.mxu0 0.0
    %494 = vmatprep.subr.mxu0 0.0
    %495 = vmatpush1.xpose.msra.mxu0 0.0
    %496 = vmatprep.subr.mxu0 0.0
    %497 = vmatpush1.xpose.msra.mxu0 0.0
    %498 = vmatprep.subr.mxu0 0.0
    %499 = vmatpush1.xpose.msra.mxu0 0.0
    %500 = vmatprep.subr.mxu0 0.0
    %501 = vmatpush1.xpose.msra.mxu0 0.0
    %502 = vmatprep.subr.mxu0 0.0
    %503 = vmatpush1.xpose.msra.mxu0 0.0
    %504 = vmatprep.subr.mxu0 0.0
    %505 = vmatpush1.xpose.msra.mxu0 0.0
    %506 = vmatprep.subr.mxu0 0.0
    %507 = vmatpush1.xpose.msra.mxu0 0.0
    %508 = vmatprep.subr.mxu0 0.0
    %509 = vmatpush1.xpose.msra.mxu0 0.0
    %510 = vmatprep.subr.mxu0 0.0
    %511 = vmatpush1.xpose.msra.mxu0 0.0
    %512 = vmatprep.subr.mxu0 0.0
    %513 = vmatpush1.xpose.msra.mxu0 0.0
    %514 = vmatprep.mubr.f32.mxu0 0.0
    %515 = vmatmul.mubr.f32.gmra.mrb[0].mxu0 %v446
    %v516 = vpop.f32.mrb[0].mxu0
    %v517 = vadd.f32 0.0, %v516
    %v518 = vpop.f32.mrb[0].mxu0
    %519 = vdwg.mxu0
    %v520 = vsel %vm186, %v517, -inf
    %521 = vmax.xlane.f32.xlu0 %v520
    %v522 = vpop.xlane.xlu0 %521
    %v523 = vsub.f32 %v517, %v522
    %v524 = vmul.f32 %v523, 1.442695
    %v525 = vpow.pop %v524
    %v526 = vsel %vm186, %v525, 0.0
    %527 = vadd.xlane.f32.xlu0 %v526
    %v528 = vpop.xlane.xlu0 %527
    %529 = vrot.lane.b32.xlu0 %v105, 64
    %v530 = vpop.permute.xlu0 %529
    %v533 = vsel %vm186, %v525, 0
    %535 = vmatprep.subr.mxu0 0.0
    %536 = vmatpush1.msra.mxu0 %v530
    %537 = vmatprep.subr.mxu0 0.0
    %538 = vmatpush1.msra.mxu0 0.0
    %539 = vmatprep.subr.mxu0 0.0
    %540 = vmatpush1.msra.mxu0 0.0
    %541 = vmatprep.subr.mxu0 0.0
    %542 = vmatpush1.msra.mxu0 0.0
    %543 = vmatprep.subr.mxu0 0.0
    %544 = vmatpush1.msra.mxu0 0.0
    %545 = vmatprep.subr.mxu0 0.0
    %546 = vmatpush1.msra.mxu0 0.0
    %547 = vmatprep.subr.mxu0 0.0
    %548 = vmatpush1.msra.mxu0 0.0
    %549 = vmatprep.subr.mxu0 0.0
    %550 = vmatpush1.msra.mxu0 0.0
    %551 = vmatprep.subr.mxu0 0.0
    %552 = vmatpush1.msra.mxu0 0.0
    %553 = vmatprep.subr.mxu0 0.0
    %554 = vmatpush1.msra.mxu0 0.0
    %555 = vmatprep.subr.mxu0 0.0
    %556 = vmatpush1.msra.mxu0 0.0
    %557 = vmatprep.subr.mxu0 0.0
    %558 = vmatpush1.msra.mxu0 0.0
    %559 = vmatprep.subr.mxu0 0.0
    %560 = vmatpush1.msra.mxu0 0.0
    %561 = vmatprep.subr.mxu0 0.0
    %562 = vmatpush1.msra.mxu0 0.0
    %563 = vmatprep.subr.mxu0 0.0
    %564 = vmatpush1.msra.mxu0 0.0
    %565 = vmatprep.subr.mxu0 0.0
    %566 = vmatpush1.msra.mxu0 0.0
    %567 = vmatprep.subr.mxu0 0.0
    %568 = vmatpush1.msra.mxu0 0.0
    %569 = vmatprep.subr.mxu0 0.0
    %570 = vmatpush1.msra.mxu0 0.0
    %571 = vmatprep.subr.mxu0 0.0
    %572 = vmatpush1.msra.mxu0 0.0
    %573 = vmatprep.subr.mxu0 0.0
    %574 = vmatpush1.msra.mxu0 0.0
    %575 = vmatprep.subr.mxu0 0.0
    %576 = vmatpush1.msra.mxu0 0.0
    %577 = vmatprep.subr.mxu0 0.0
    %578 = vmatpush1.msra.mxu0 0.0
    %579 = vmatprep.subr.mxu0 0.0
    %580 = vmatpush1.msra.mxu0 0.0
    %581 = vmatprep.subr.mxu0 0.0
    %582 = vmatpush1.msra.mxu0 0.0
    %583 = vmatprep.subr.mxu0 0.0
    %584 = vmatpush1.msra.mxu0 0.0
    %585 = vmatprep.subr.mxu0 0.0
    %586 = vmatpush1.msra.mxu0 0.0
    %587 = vmatprep.subr.mxu0 0.0
    %588 = vmatpush1.msra.mxu0 0.0
    %589 = vmatprep.subr.mxu0 0.0
    %590 = vmatpush1.msra.mxu0 0.0
    %591 = vmatprep.subr.mxu0 0.0
    %592 = vmatpush1.msra.mxu0 0.0
    %593 = vmatprep.subr.mxu0 0.0
    %594 = vmatpush1.msra.mxu0 0.0
    %595 = vmatprep.subr.mxu0 0.0
    %596 = vmatpush1.msra.mxu0 0.0
    %597 = vmatprep.subr.mxu0 0.0
    %598 = vmatpush1.msra.mxu0 0.0
    %599 = vmatprep.mubr.f32.mxu0 0.0
    %600 = vmatmul.mubr.f32.gmra.mrb[0].mxu0 %v533
    %v601 = vpop.f32.mrb[0].mxu0
    %v602 = vadd.f32 0.0, %v601
    %v603 = vpop.f32.mrb[0].mxu0
    %604 = vdwg.mxu0
    %v605 = vrcp.pop %v528
    %v606 = vmul.f32 %v602, %v605
    %607 = vrot.lane.b32.xlu0 %v105, 32
    %v608 = vpop.permute.xlu0 %607
    %v609 = vsel %vm25, %v608, 0
    %v612 = vsel %vm25, %v107, 0
    %614 = vmatprep.subr.mxu0 0.0
    %615 = vmatpush1.xpose.msra.mxu0 %v612
    %616 = vmatprep.subr.mxu0 0.0
    %617 = vmatpush1.xpose.msra.mxu0 0.0
    %618 = vmatprep.subr.mxu0 0.0
    %619 = vmatpush1.xpose.msra.mxu0 0.0
    %620 = vmatprep.subr.mxu0 0.0
    %621 = vmatpush1.xpose.msra.mxu0 0.0
    %622 = vmatprep.subr.mxu0 0.0
    %623 = vmatpush1.xpose.msra.mxu0 0.0
    %624 = vmatprep.subr.mxu0 0.0
    %625 = vmatpush1.xpose.msra.mxu0 0.0
    %626 = vmatprep.subr.mxu0 0.0
    %627 = vmatpush1.xpose.msra.mxu0 0.0
    %628 = vmatprep.subr.mxu0 0.0
    %629 = vmatpush1.xpose.msra.mxu0 0.0
    %630 = vmatprep.subr.mxu0 0.0
    %631 = vmatpush1.xpose.msra.mxu0 0.0
    %632 = vmatprep.subr.mxu0 0.0
    %633 = vmatpush1.xpose.msra.mxu0 0.0
    %634 = vmatprep.subr.mxu0 0.0
    %635 = vmatpush1.xpose.msra.mxu0 0.0
    %636 = vmatprep.subr.mxu0 0.0
    %637 = vmatpush1.xpose.msra.mxu0 0.0
    %638 = vmatprep.subr.mxu0 0.0
    %639 = vmatpush1.xpose.msra.mxu0 0.0
    %640 = vmatprep.subr.mxu0 0.0
    %641 = vmatpush1.xpose.msra.mxu0 0.0
    %642 = vmatprep.subr.mxu0 0.0
    %643 = vmatpush1.xpose.msra.mxu0 0.0
    %644 = vmatprep.subr.mxu0 0.0
    %645 = vmatpush1.xpose.msra.mxu0 0.0
    %646 = vmatprep.subr.mxu0 0.0
    %647 = vmatpush1.xpose.msra.mxu0 0.0
    %648 = vmatprep.subr.mxu0 0.0
    %649 = vmatpush1.xpose.msra.mxu0 0.0
    %650 = vmatprep.subr.mxu0 0.0
    %651 = vmatpush1.xpose.msra.mxu0 0.0
    %652 = vmatprep.subr.mxu0 0.0
    %653 = vmatpush1.xpose.msra.mxu0 0.0
    %654 = vmatprep.subr.mxu0 0.0
    %655 = vmatpush1.xpose.msra.mxu0 0.0
    %656 = vmatprep.subr.mxu0 0.0
    %657 = vmatpush1.xpose.msra.mxu0 0.0
    %658 = vmatprep.subr.mxu0 0.0
    %659 = vmatpush1.xpose.msra.mxu0 0.0
    %660 = vmatprep.subr.mxu0 0.0
    %661 = vmatpush1.xpose.msra.mxu0 0.0
    %662 = vmatprep.subr.mxu0 0.0
    %663 = vmatpush1.xpose.msra.mxu0 0.0
    %664 = vmatprep.subr.mxu0 0.0
    %665 = vmatpush1.xpose.msra.mxu0 0.0
    %666 = vmatprep.subr.mxu0 0.0
    %667 = vmatpush1.xpose.msra.mxu0 0.0
    %668 = vmatprep.subr.mxu0 0.0
    %669 = vmatpush1.xpose.msra.mxu0 0.0
    %670 = vmatprep.subr.mxu0 0.0
    %671 = vmatpush1.xpose.msra.mxu0 0.0
    %672 = vmatprep.subr.mxu0 0.0
    %673 = vmatpush1.xpose.msra.mxu0 0.0
    %674 = vmatprep.subr.mxu0 0.0
    %675 = vmatpush1.xpose.msra.mxu0 0.0
    %676 = vmatprep.subr.mxu0 0.0
    %677 = vmatpush1.xpose.msra.mxu0 0.0
    %678 = vmatprep.mubr.f32.mxu0 0.0
    %679 = vmatmul.mubr.f32.gmra.mrb[0].mxu0 %v609
    %v680 = vpop.f32.mrb[0].mxu0
    %v681 = vadd.f32 0.0, %v680
    %v682 = vpop.f32.mrb[0].mxu0
    %683 = vdwg.mxu0
    %v684 = vsel %vm186, %v681, -inf
    %685 = vmax.xlane.f32.xlu0 %v684
    %v686 = vpop.xlane.xlu0 %685
    %v687 = vsub.f32 %v681, %v686
    %v688 = vmul.f32 %v687, 1.442695
    %v689 = vpow.pop %v688
    %v690 = vsel %vm186, %v689, 0.0
    %691 = vadd.xlane.f32.xlu0 %v690
    %v692 = vpop.xlane.xlu0 %691
    %693 = vrot.lane.b32.xlu0 %v107, 96
    %v694 = vpop.permute.xlu0 %693
    %v697 = vsel %vm186, %v689, 0
    %699 = vmatprep.subr.mxu0 0.0
    %700 = vmatpush1.msra.mxu0 %v694
    %701 = vmatprep.subr.mxu0 0.0
    %702 = vmatpush1.msra.mxu0 0.0
    %703 = vmatprep.subr.mxu0 0.0
    %704 = vmatpush1.msra.mxu0 0.0
    %705 = vmatprep.subr.mxu0 0.0
    %706 = vmatpush1.msra.mxu0 0.0
    %707 = vmatprep.subr.mxu0 0.0
    %708 = vmatpush1.msra.mxu0 0.0
    %709 = vmatprep.subr.mxu0 0.0
    %710 = vmatpush1.msra.mxu0 0.0
    %711 = vmatprep.subr.mxu0 0.0
    %712 = vmatpush1.msra.mxu0 0.0
    %713 = vmatprep.subr.mxu0 0.0
    %714 = vmatpush1.msra.mxu0 0.0
    %715 = vmatprep.subr.mxu0 0.0
    %716 = vmatpush1.msra.mxu0 0.0
    %717 = vmatprep.subr.mxu0 0.0
    %718 = vmatpush1.msra.mxu0 0.0
    %719 = vmatprep.subr.mxu0 0.0
    %720 = vmatpush1.msra.mxu0 0.0
    %721 = vmatprep.subr.mxu0 0.0
    %722 = vmatpush1.msra.mxu0 0.0
    %723 = vmatprep.subr.mxu0 0.0
    %724 = vmatpush1.msra.mxu0 0.0
    %725 = vmatprep.subr.mxu0 0.0
    %726 = vmatpush1.msra.mxu0 0.0
    %727 = vmatprep.subr.mxu0 0.0
    %728 = vmatpush1.msra.mxu0 0.0
    %729 = vmatprep.subr.mxu0 0.0
    %730 = vmatpush1.msra.mxu0 0.0
    %731 = vmatprep.subr.mxu0 0.0
    %732 = vmatpush1.msra.mxu0 0.0
    %733 = vmatprep.subr.mxu0 0.0
    %734 = vmatpush1.msra.mxu0 0.0
    %735 = vmatprep.subr.mxu0 0.0
    %736 = vmatpush1.msra.mxu0 0.0
    %737 = vmatprep.subr.mxu0 0.0
    %738 = vmatpush1.msra.mxu0 0.0
    %739 = vmatprep.subr.mxu0 0.0
    %740 = vmatpush1.msra.mxu0 0.0
    %741 = vmatprep.subr.mxu0 0.0
    %742 = vmatpush1.msra.mxu0 0.0
    %743 = vmatprep.subr.mxu0 0.0
    %744 = vmatpush1.msra.mxu0 0.0
    %745 = vmatprep.subr.mxu0 0.0
    %746 = vmatpush1.msra.mxu0 0.0
    %747 = vmatprep.subr.mxu0 0.0
    %748 = vmatpush1.msra.mxu0 0.0
    %749 = vmatprep.subr.mxu0 0.0
    %750 = vmatpush1.msra.mxu0 0.0
    %751 = vmatprep.subr.mxu0 0.0
    %752 = vmatpush1.msra.mxu0 0.0
    %753 = vmatprep.subr.mxu0 0.0
    %754 = vmatpush1.msra.mxu0 0.0
    %755 = vmatprep.subr.mxu0 0.0
    %756 = vmatpush1.msra.mxu0 0.0
    %757 = vmatprep.subr.mxu0 0.0
    %758 = vmatpush1.msra.mxu0 0.0
    %759 = vmatprep.subr.mxu0 0.0
    %760 = vmatpush1.msra.mxu0 0.0
    %761 = vmatprep.subr.mxu0 0.0
    %762 = vmatpush1.msra.mxu0 0.0
    %763 = vmatprep.mubr.f32.mxu0 0.0
    %764 = vmatmul.mubr.f32.gmra.mrb[0].mxu0 %v697
    %v765 = vpop.f32.mrb[0].mxu0
    %v766 = vadd.f32 0.0, %v765
    %v767 = vpop.f32.mrb[0].mxu0
    %768 = vdwg.mxu0
    %v769 = vrcp.pop %v692
    %v770 = vmul.f32 %v766, %v769
    %772 = vrot.lane.b32.xlu0 %v770, 32
    %v773 = vpop.permute.xlu0 %772
    %v775 = vsel %vm25, %v606, %v773
    %v776 = vld [vmem:[%s2] sm:$0xff]
    %v777 = vld [vmem:[%s2 + $0x8] sm:$0xff]
    %v778 = vld [vmem:[%s2 + $0x10] sm:$0xff]
    %v779 = vld [vmem:[%s2 + $0x18] sm:$0xff]
    %v780 = vld [vmem:[%s2 + $0x20] sm:$0xff]
    %v781 = vld [vmem:[%s2 + $0x28] sm:$0xff]
    %v782 = vld [vmem:[%s2 + $0x30] sm:$0xff]
    %v783 = vld [vmem:[%s2 + $0x38] sm:$0xff]
    %vm784 = vcmask 523264
    %v786 = vsel %vm784, %v442, 0
    %v789 = vsel %vm784, %v775, 0
    %791 = vmatprep.subr.mxu0 0.0
    %792 = vmatpush1.msra.mxu0 %v776
    %793 = vmatprep.subr.mxu0 0.0
    %794 = vmatpush1.msra.mxu0 %v777
    %795 = vmatprep.subr.mxu0 0.0
    %796 = vmatpush1.msra.mxu0 %v778
    %797 = vmatprep.subr.mxu0 0.0
    %798 = vmatpush1.msra.mxu0 %v779
    %799 = vmatprep.subr.mxu0 0.0
    %800 = vmatpush1.msra.mxu0 %v780
    %801 = vmatprep.subr.mxu0 0.0
    %802 = vmatpush1.msra.mxu0 %v781
    %803 = vmatprep.subr.mxu0 0.0
    %804 = vmatpush1.msra.mxu0 %v782
    %805 = vmatprep.subr.mxu0 0.0
    %806 = vmatpush1.msra.mxu0 %v783
    %807 = vmatprep.subr.mxu0 0.0
    %808 = vmatpush1.msra.mxu0 0.0
    %809 = vmatprep.subr.mxu0 0.0
    %810 = vmatpush1.msra.mxu0 0.0
    %811 = vmatprep.subr.mxu0 0.0
    %812 = vmatpush1.msra.mxu0 0.0
    %813 = vmatprep.subr.mxu0 0.0
    %814 = vmatpush1.msra.mxu0 0.0
    %815 = vmatprep.subr.mxu0 0.0
    %816 = vmatpush1.msra.mxu0 0.0
    %817 = vmatprep.subr.mxu0 0.0
    %818 = vmatpush1.msra.mxu0 0.0
    %819 = vmatprep.subr.mxu0 0.0
    %820 = vmatpush1.msra.mxu0 0.0
    %821 = vmatprep.subr.mxu0 0.0
    %822 = vmatpush1.msra.mxu0 0.0
    %823 = vmatprep.subr.mxu0 0.0
    %824 = vmatpush1.msra.mxu0 0.0
    %825 = vmatprep.subr.mxu0 0.0
    %826 = vmatpush1.msra.mxu0 0.0
    %827 = vmatprep.subr.mxu0 0.0
    %828 = vmatpush1.msra.mxu0 0.0
    %829 = vmatprep.subr.mxu0 0.0
    %830 = vmatpush1.msra.mxu0 0.0
    %831 = vmatprep.subr.mxu0 0.0
    %832 = vmatpush1.msra.mxu0 0.0
    %833 = vmatprep.subr.mxu0 0.0
    %834 = vmatpush1.msra.mxu0 0.0
    %835 = vmatprep.subr.mxu0 0.0
    %836 = vmatpush1.msra.mxu0 0.0
    %837 = vmatprep.subr.mxu0 0.0
    %838 = vmatpush1.msra.mxu0 0.0
    %839 = vmatprep.subr.mxu0 0.0
    %840 = vmatpush1.msra.mxu0 0.0
    %841 = vmatprep.subr.mxu0 0.0
    %842 = vmatpush1.msra.mxu0 0.0
    %843 = vmatprep.subr.mxu0 0.0
    %844 = vmatpush1.msra.mxu0 0.0
    %845 = vmatprep.subr.mxu0 0.0
    %846 = vmatpush1.msra.mxu0 0.0
    %847 = vmatprep.subr.mxu0 0.0
    %848 = vmatpush1.msra.mxu0 0.0
    %849 = vmatprep.subr.mxu0 0.0
    %850 = vmatpush1.msra.mxu0 0.0
    %851 = vmatprep.subr.mxu0 0.0
    %852 = vmatpush1.msra.mxu0 0.0
    %853 = vmatprep.subr.mxu0 0.0
    %854 = vmatpush1.msra.mxu0 0.0
    %855 = vmatprep.mubr.f32.mxu0 0.0
    %856 = vmatmul.mubr.f32.gmra.mrb[0].mxu0 %v786
    %v857 = vpop.f32.mrb[0].mxu0
    %v858 = vadd.f32 0.0, %v857
    %v859 = vpop.f32.mrb[0].mxu0
    %860 = vmatprep.mubr.f32.mxu0 0.0
    %861 = vmatmul.mubr.f32.gmra.mrb[0].mxu0 %v789
    %v862 = vpop.f32.mrb[0].mxu0
    %v863 = vadd.f32 0.0, %v862
    %v864 = vpop.f32.mrb[0].mxu0
    %865 = vdwg.mxu0
    %866 = vst.msk [vmem:[#allocation2] sm:$0xff] %vm25, %v858
    %867 = vst.msk [vmem:[#allocation2 + $0x8] sm:$0xff] %vm25, %v863
    // Predicated region
    $region14: #{tpu_custom_call.1} parent=1 // pred_check
      _
    $region15: #{tpu_custom_call.1} parent=1 // pred_check_branch
      %869 = sbr.rel (0) target = $region17
    $region16: #{tpu_custom_call.1} parent=1 // pred_region
      %s871 = ssub.s32 256, 256
      %872 = vsyncadd [#allocation3], %s871
      %s873 = sshll.u32 [#allocation2], 4
      %s874 = int_to_ptr.vmem [resolvable:$true] %s873
      %879 = dma.vmem_to_hbm [thread:$0]  %s874, 256, %s3, [#allocation3], 128, 128, 8
    $region17: #{tpu_custom_call.1} parent=1 // pred_fallthru
      _
    // Predicated region
    $region18: #{tpu_custom_call.1} parent=1 // pred_check
      _
    $region19: #{tpu_custom_call.1} parent=1 // pred_check_branch
      %881 = sbr.rel (0) target = $region21
    $region20: #{tpu_custom_call.1} parent=1 // pred_region
      %882 = dma.done [#allocation3], 256
    $region21: #{tpu_custom_call.1} parent=1 // pred_fallthru
      _
    %883 = vsyncpa [#allocation3], 1

</llo_original>
